<compile_context>
chip_gen: v6e
topology: v6e:2x2x1
jax: 0.10.0
libtpu: 0.0.40
codegen_flags: <defaults>
</compile_context>

<pallas_src>
import jax
import jax.numpy as jnp
from jax.experimental import pallas as pl
from jax.experimental.pallas import tpu as pltpu


def _round_up(x, m):
    return ((x + m - 1) // m) * m


def _mlp_kernel(x_ref, w1_ref, b1_ref, w2_ref, b2_ref, w3_ref, b3_ref, o_ref):
    # Layer 1: Linear(D -> H1) + ReLU   (Dropout = identity in eval)
    h1 = jnp.dot(x_ref[...], w1_ref[...], preferred_element_type=jnp.float32)
    h1 = jnp.maximum(h1 + b1_ref[...], 0.0)
    # Layer 2: Linear(H1 -> H2) + ReLU  (cast back to MXU dtype, accumulate f32)
    h2 = jnp.dot(h1.astype(w2_ref.dtype), w2_ref[...],
                 preferred_element_type=jnp.float32)
    h2 = jnp.maximum(h2 + b2_ref[...], 0.0)
    # Output head: Linear(H2 -> 2)
    out = jnp.dot(h2.astype(w3_ref.dtype), w3_ref[...],
                  preferred_element_type=jnp.float32)
    o_ref[...] = (out + b3_ref[...]).astype(o_ref.dtype)


def _vmem_bytes_estimate(bt, D, H1, H2, OUT, itemsize):
    """Rough per-tile VMEM footprint including (8,128)-tiling lane/sublane padding
    and BlockSpec double-buffering."""
    def pad_lanes(n):
        return _round_up(n, 128)

    def pad_sub(n, isz):
        # sub-32-bit dtypes pack along sublanes; a row group is 8 * (4 // isz) rows
        return _round_up(n, 8 * max(1, 4 // isz))

    bt8 = _round_up(bt, 8)
    # x tile: double-buffered, compute dtype, D pads to 128 lanes
    x_b = 2 * pad_sub(bt, itemsize) * pad_lanes(D) * itemsize
    # output tile: double-buffered, f32, OUT pads to 128 lanes
    o_b = 2 * bt8 * pad_lanes(OUT) * 4
    # f32 intermediates h1 / h2 live as VMEM temporaries
    h_b = bt8 * (pad_lanes(H1) + pad_lanes(H2)) * 4
    # weights: constant index_map but still double-buffered
    w_b = 2 * itemsize * (pad_sub(D, itemsize) * pad_lanes(H1)
                          + pad_sub(H1, itemsize) * pad_lanes(H2)
                          + pad_sub(H2, itemsize) * pad_lanes(OUT))
    # biases: (1, H) pads sublanes to 8, f32, double-buffered
    b_b = 2 * 4 * 8 * (pad_lanes(H1) + pad_lanes(H2) + pad_lanes(OUT))
    return x_b + o_b + h_b + w_b + b_b


def circadian_net_forward(x, params, *, batch_tile=2048, compute_dtype=jnp.bfloat16):
    """Fused MLP forward. x: (B, input_dim) float32. Returns (B, 2) float32.

    batch_tile is a swept knob; it is clamped to a multiple of 8, to the
    (8-rounded) batch size, capped so the grid has >= 2 steps when possible
    (both v7x TensorCores), and auto-shrunk to a per-tile VMEM budget. The batch
    is zero-padded to a tile multiple and the result sliced back, so ragged B is
    handled.
    """
    w1, b1, w2, b2, w3, b3 = params
    B, D = x.shape
    H1 = w1.shape[1]
    H2 = w2.shape[1]
    OUT = w3.shape[1]
    itemsize = jnp.dtype(compute_dtype).itemsize

    # --- Tile selection ---------------------------------------------------
    bt = max(8, min(int(batch_tile), _round_up(B, 8)))
    bt = _round_up(bt, 8)
    Bp8 = _round_up(B, 8)
    if Bp8 >= 16:
        # Guarantee >= 2 grid steps so dimension_semantics=("parallel",) can
        # shard across both v7x TensorCores instead of leaving one idle.
        bt = min(bt, _round_up(-(-Bp8 // 2), 8))
    # Per-tile VMEM budget: keep two concurrent tiles (one per v7x TC) within the
    # 32 MiB default scoped limit / 64 MiB physical, and a single tile within
    # v5e's 16 MiB default scoped limit with headroom.
    VMEM_TILE_BUDGET = 14 << 20
    while bt > 8 and _vmem_bytes_estimate(bt, D, H1, H2, OUT, itemsize) > VMEM_TILE_BUDGET:
        bt = max(8, _round_up(bt // 2, 8))
    Bp = _round_up(B, bt)
    num_tiles = Bp // bt

    # --- Operand prep -------------------------------------------------------
    # Cast activations/weights to the MXU-native dtype; biases stay f32 (added to
    # the f32 accumulator inside the kernel). Padded rows are sliced off at the end.
    xc = x.astype(compute_dtype)
    if Bp != B:
        xc = jnp.pad(xc, ((0, Bp - B), (0, 0)))
    w1c = w1.astype(compute_dtype)
    w2c = w2.astype(compute_dtype)
    w3c = w3.astype(compute_dtype)
    b1f = b1.astype(jnp.float32)
    b2f = b2.astype(jnp.float32)
    b3f = b3.astype(jnp.float32)

    # x is tiled over batch with default double-buffering (x DMA per tile is tiny
    # vs. the 3*bt/8 MXU pushes, so depth 2 already hides it completely).
    in_specs = [
        pl.BlockSpec((bt, D), lambda i: (i, 0)),       # x tile
        pl.BlockSpec((D, H1), lambda i: (0, 0)),       # w1 (resident)
        pl.BlockSpec((1, H1), lambda i: (0, 0)),       # b1
        pl.BlockSpec((H1, H2), lambda i: (0, 0)),      # w2
        pl.BlockSpec((1, H2), lambda i: (0, 0)),       # b2
        pl.BlockSpec((H2, OUT), lambda i: (0, 0)),     # w3 (OUT=2 left unpadded)
        pl.BlockSpec((1, OUT), lambda i: (0, 0)),      # b3
    ]
    out_specs = pl.BlockSpec((bt, OUT), lambda i: (i, 0))

    weight_bytes = (D * H1 + H1 * H2 + H2 * OUT) * itemsize + (H1 + H2 + OUT) * 4
    cost = pl.CostEstimate(
        flops=2 * Bp * (D * H1 + H1 * H2 + H2 * OUT),
        transcendentals=0,
        bytes_accessed=Bp * D * itemsize + Bp * OUT * 4 + weight_bytes,
    )

    # Explicit scoped-VMEM limit derived from the padded footprint so Mosaic never
    # silently shrinks pipelining at large tiles (capped under v7x's 64 MiB physical).
    vmem_est = _vmem_bytes_estimate(bt, D, H1, H2, OUT, itemsize)
    vmem_limit = int(min(max(32 << 20, vmem_est + (4 << 20)), 60 << 20))

    out = pl.pallas_call(
        _mlp_kernel,
        out_shape=jax.ShapeDtypeStruct((Bp, OUT), jnp.float32),
        grid_spec=pl.GridSpec(
            grid=(num_tiles,),
            in_specs=in_specs,
            out_specs=out_specs,
        ),
        compiler_params=pltpu.CompilerParams(
            dimension_semantics=("parallel",),
            vmem_limit_bytes=vmem_limit,
        ),
        cost_estimate=cost,
    )(xc, w1c, b1f, w2c, b2f, w3c, b3f)

    return out[:B] if Bp != B else out


def init_params(key, input_dim, hidden_dims=(256, 128), out_dim=2):
    """Deterministic init (uniform[-1/sqrt(fan_in), 1/sqrt(fan_in)], like PyTorch Linear)."""
    dims = [input_dim] + list(hidden_dims) + [out_dim]
    params = []
    for i in range(len(dims) - 1):
        fan_in, fan_out = dims[i], dims[i + 1]
        key, kw, kb = jax.random.split(key, 3)
        bound = 1.0 / (fan_in ** 0.5)
        w = jax.random.uniform(kw, (fan_in, fan_out), jnp.float32, -bound, bound)
        b = jax.random.uniform(kb, (1, fan_out), jnp.float32, -bound, bound)
        params += [w, b]
    return tuple(params)


def _reference_forward(x, params, compute_dtype=jnp.bfloat16):
    """Pure-JAX reference using the same compute-dtype operand / f32-accumulate recipe."""
    w1, b1, w2, b2, w3, b3 = params
    cd = compute_dtype
    h1 = jnp.dot(x.astype(cd), w1.astype(cd), preferred_element_type=jnp.float32) + b1
    h1 = jnp.maximum(h1, 0.0)
    h2 = jnp.dot(h1.astype(cd), w2.astype(cd), preferred_element_type=jnp.float32) + b2
    h2 = jnp.maximum(h2, 0.0)
    return jnp.dot(h2.astype(cd), w3.astype(cd), preferred_element_type=jnp.float32) + b3


if __name__ == "__main__":
    key = jax.random.PRNGKey(0)
    k_x, k_x2, k_p = jax.random.split(key, 3)

    input_dim = 32
    params = init_params(k_p, input_dim, hidden_dims=(256, 128), out_dim=2)

    # Case 1: batch of 16 -> the ">=2 grid steps" cap splits it into 2 tiles of 8
    # (exercises the megacore-friendly path). bf16 operands, f32 accumulate.
    batch = 16
    x = jax.random.normal(k_x, (batch, input_dim), dtype=jnp.float32)
    out = jax.block_until_ready(circadian_net_forward(x, params))
    ref = _reference_forward(x, params)
    assert out.shape == (batch, 2)
    assert jnp.allclose(out, ref, atol=1e-2, rtol=1e-2)

    # Case 2: ragged batch with a small explicit tile (grid=(3,), zero-pad + slice).
    batch2 = 20
    x2 = jax.random.normal(k_x2, (batch2, input_dim), dtype=jnp.float32)
    out2 = jax.block_until_ready(circadian_net_forward(x2, params, batch_tile=8))
    ref2 = _reference_forward(x2, params)
    assert out2.shape == (batch2, 2)
    assert jnp.allclose(out2, ref2, atol=1e-2, rtol=1e-2)

    # Case 3: f32 escape hatch -- PyTorch-parity numerics (tight tolerance).
    out3 = jax.block_until_ready(
        circadian_net_forward(x, params, compute_dtype=jnp.float32))
    ref3 = _reference_forward(x, params, compute_dtype=jnp.float32)
    assert out3.shape == (batch, 2)
    assert jnp.allclose(out3, ref3, atol=1e-5, rtol=1e-5)

    print("KERNEL_OK")
</pallas_src>

<mosaic_0001>
module attributes {stable_mosaic.version = 11 : i64} {
  func.func @_mlp_kernel(%arg0: i32, %arg1: memref<8x32xbf16, #tpu.memory_space<vmem>>, %arg2: memref<32x256xbf16, #tpu.memory_space<vmem>>, %arg3: memref<1x256xf32, #tpu.memory_space<vmem>>, %arg4: memref<256x128xbf16, #tpu.memory_space<vmem>>, %arg5: memref<1x128xf32, #tpu.memory_space<vmem>>, %arg6: memref<128x2xbf16, #tpu.memory_space<vmem>>, %arg7: memref<1x2xf32, #tpu.memory_space<vmem>>, %arg8: memref<8x2xf32, #tpu.memory_space<vmem>>) attributes {dimension_semantics = [#tpu.dimension_semantics<parallel>], iteration_bounds = array<i64: 2>, scalar_prefetch = 0 : i64, scratch_operands = 0 : i64, tpu.core_type = #tpu.core_type<tc>, window_params = [{transform_indices = @transform_0, window_bounds = array<i64: 8, 32>}, {pipeline_mode = #tpu.pipeline_mode<synchronous>, transform_indices = @transform_1, window_bounds = array<i64: 32, 256>}, {pipeline_mode = #tpu.pipeline_mode<synchronous>, transform_indices = @transform_2, window_bounds = array<i64: 1, 256>}, {pipeline_mode = #tpu.pipeline_mode<synchronous>, transform_indices = @transform_3, window_bounds = array<i64: 256, 128>}, {pipeline_mode = #tpu.pipeline_mode<synchronous>, transform_indices = @transform_4, window_bounds = array<i64: 1, 128>}, {pipeline_mode = #tpu.pipeline_mode<synchronous>, transform_indices = @transform_5, window_bounds = array<i64: 128, 2>}, {pipeline_mode = #tpu.pipeline_mode<synchronous>, transform_indices = @transform_6, window_bounds = array<i64: 1, 2>}, {transform_indices = @transform_7, window_bounds = array<i64: 8, 2>}]} {
    %c0 = arith.constant 0 : index
    %c0_0 = arith.constant 0 : index
    %0 = vector.load %arg1[%c0, %c0_0] : memref<8x32xbf16, #tpu.memory_space<vmem>>, vector<8x32xbf16>
    %c0_1 = arith.constant 0 : index
    %c0_2 = arith.constant 0 : index
    %1 = vector.load %arg2[%c0_1, %c0_2] : memref<32x256xbf16, #tpu.memory_space<vmem>>, vector<32x256xbf16>
    %cst = arith.constant dense<0.000000e+00> : vector<8x256xf32>
    %2 = tpu.matmul %0, %1, %cst {dimension_numbers = #tpu.dot_dimension_numbers<[1], [0], [0], [1], [0, 0, 1, 1], [], []>} : vector<8x32xbf16>, vector<32x256xbf16>, vector<8x256xf32> -> vector<8x256xf32>
    %c0_3 = arith.constant 0 : index
    %c0_4 = arith.constant 0 : index
    %3 = vector.load %arg3[%c0_3, %c0_4] : memref<1x256xf32, #tpu.memory_space<vmem>>, vector<1x256xf32>
    %4 = vector.broadcast %3 : vector<1x256xf32> to vector<8x256xf32>
    %5 = arith.addf %2, %4 : vector<8x256xf32>
    %cst_5 = arith.constant 0.000000e+00 : f32
    %6 = vector.broadcast %cst_5 : f32 to vector<8x256xf32>
    %7 = arith.maximumf %5, %6 : vector<8x256xf32>
    %8 = arith.truncf %7 : vector<8x256xf32> to vector<8x256xbf16>
    %c0_6 = arith.constant 0 : index
    %c0_7 = arith.constant 0 : index
    %9 = vector.load %arg4[%c0_6, %c0_7] : memref<256x128xbf16, #tpu.memory_space<vmem>>, vector<256x128xbf16>
    %cst_8 = arith.constant dense<0.000000e+00> : vector<8x128xf32>
    %10 = tpu.matmul %8, %9, %cst_8 {dimension_numbers = #tpu.dot_dimension_numbers<[1], [0], [0], [1], [0, 0, 1, 1], [], []>} : vector<8x256xbf16>, vector<256x128xbf16>, vector<8x128xf32> -> vector<8x128xf32>
    %c0_9 = arith.constant 0 : index
    %c0_10 = arith.constant 0 : index
    %11 = vector.load %arg5[%c0_9, %c0_10] : memref<1x128xf32, #tpu.memory_space<vmem>>, vector<1x128xf32>
    %12 = vector.broadcast %11 : vector<1x128xf32> to vector<8x128xf32>
    %13 = arith.addf %10, %12 : vector<8x128xf32>
    %cst_11 = arith.constant 0.000000e+00 : f32
    %14 = vector.broadcast %cst_11 : f32 to vector<8x128xf32>
    %15 = arith.maximumf %13, %14 : vector<8x128xf32>
    %16 = arith.truncf %15 : vector<8x128xf32> to vector<8x128xbf16>
    %c0_12 = arith.constant 0 : index
    %c0_13 = arith.constant 0 : index
    %17 = vector.load %arg6[%c0_12, %c0_13] : memref<128x2xbf16, #tpu.memory_space<vmem>>, vector<128x2xbf16>
    %cst_14 = arith.constant dense<0.000000e+00> : vector<8x2xf32>
    %18 = tpu.matmul %16, %17, %cst_14 {dimension_numbers = #tpu.dot_dimension_numbers<[1], [0], [0], [1], [0, 0, 1, 1], [], []>} : vector<8x128xbf16>, vector<128x2xbf16>, vector<8x2xf32> -> vector<8x2xf32>
    %c0_15 = arith.constant 0 : index
    %c0_16 = arith.constant 0 : index
    %19 = vector.load %arg7[%c0_15, %c0_16] : memref<1x2xf32, #tpu.memory_space<vmem>>, vector<1x2xf32>
    %20 = vector.broadcast %19 : vector<1x2xf32> to vector<8x2xf32>
    %21 = arith.addf %18, %20 : vector<8x2xf32>
    %c0_17 = arith.constant 0 : index
    %c0_18 = arith.constant 0 : index
    %22 = vector.load %arg8[%c0_17, %c0_18] : memref<8x2xf32, #tpu.memory_space<vmem>>, vector<8x2xf32>
    tpu.vector_store %arg8[%c0_17, %c0_18], %21 {strides = array<i32>} : memref<8x2xf32, #tpu.memory_space<vmem>>, vector<8x2xf32>,
    return
  }
  func.func @transform_0(%arg0: i32) -> (i32, i32) {
    %c0_i32 = arith.constant 0 : i32
    %c0_i32_0 = arith.constant 0 : i32
    return %arg0, %c0_i32 : i32, i32
  }
  func.func @transform_1(%arg0: i32) -> (i32, i32) {
    %c0_i32 = arith.constant 0 : i32
    %c0_i32_0 = arith.constant 0 : i32
    %c0_i32_1 = arith.constant 0 : i32
    return %c0_i32, %c0_i32_0 : i32, i32
  }
  func.func @transform_2(%arg0: i32) -> (i32, i32) {
    %c0_i32 = arith.constant 0 : i32
    %c0_i32_0 = arith.constant 0 : i32
    %c0_i32_1 = arith.constant 0 : i32
    return %c0_i32, %c0_i32_0 : i32, i32
  }
  func.func @transform_3(%arg0: i32) -> (i32, i32) {
    %c0_i32 = arith.constant 0 : i32
    %c0_i32_0 = arith.constant 0 : i32
    %c0_i32_1 = arith.constant 0 : i32
    return %c0_i32, %c0_i32_0 : i32, i32
  }
  func.func @transform_4(%arg0: i32) -> (i32, i32) {
    %c0_i32 = arith.constant 0 : i32
    %c0_i32_0 = arith.constant 0 : i32
    %c0_i32_1 = arith.constant 0 : i32
    return %c0_i32, %c0_i32_0 : i32, i32
  }
  func.func @transform_5(%arg0: i32) -> (i32, i32) {
    %c0_i32 = arith.constant 0 : i32
    %c0_i32_0 = arith.constant 0 : i32
    %c0_i32_1 = arith.constant 0 : i32
    return %c0_i32, %c0_i32_0 : i32, i32
  }
  func.func @transform_6(%arg0: i32) -> (i32, i32) {
    %c0_i32 = arith.constant 0 : i32
    %c0_i32_0 = arith.constant 0 : i32
    %c0_i32_1 = arith.constant 0 : i32
    return %c0_i32, %c0_i32_0 : i32, i32
  }
  func.func @transform_7(%arg0: i32) -> (i32, i32) {
    %c0_i32 = arith.constant 0 : i32
    %c0_i32_0 = arith.constant 0 : i32
    return %arg0, %c0_i32 : i32, i32
  }
}

</mosaic_0001>

<llo_original>
// kernel: tpu_custom_call.1
$region0: #{tpu_custom_call.1}
  #allocation0 [shape = 'u32[]', space=smem, size = 0x4, offset = 0x4, fixed_abs, tag = 'smem constant byte address 0x4 - core index']
  #allocation1 [shape = 'u32[144,128]{1,0:T(1,128)}', space=vmem, size = 0x12000, scoped, tag = 'internal scratch']
  %s0 = inlined_call_operand.vmem [shape: bf16[16,32], index: 0, kind: input, shape index: {}]
  %s1 = inlined_call_operand.vmem [shape: bf16[32,256], index: 1, kind: input, shape index: {}]
  %s2 = inlined_call_operand.vmem [shape: f32[1,256], index: 2, kind: input, shape index: {}]
  %s3 = inlined_call_operand.hbm [shape: bf16[256,128], index: 3, kind: input, shape index: {}]
  %s4 = inlined_call_operand.vmem [shape: f32[1,128], index: 4, kind: input, shape index: {}]
  %s5 = inlined_call_operand.vmem [shape: bf16[128,2], index: 5, kind: input, shape index: {}]
  %s6 = inlined_call_operand.vmem [shape: f32[1,2], index: 6, kind: input, shape index: {}]
  %s7 = inlined_call_operand.vmem [shape: f32[16,2], index: 7, kind: output, shape index: {}]
  %s8 = sld [smem:[#allocation0]]
  $region65: #{tpu_custom_call.1} parent=0
    _
  %s10 = ssub.s32 1, %s8
  %s11 = scalar_select 0, %s10, %s8
  $region1: #{tpu_custom_call.1} parent=0
    #allocation2 [shape = 'u8[65536]{0}', space=vmem, size = 0x10000, scoped, tag = 'input window, operand 3, single buffered']
    #allocation3 [shape = 's32[2]{0}', space=sflag, size = 0x8, scoped, tag = 'scoped memory for tpu_custom_call.1']
    %12 = vsyncpa [#allocation3], 0
    loop: start=0, step=1, limit=4
    $region2: #{tpu_custom_call.1} parent=1 // loop_pre_header
      _
    $region3: #{tpu_custom_call.1} parent=1 // loop_header
      %s14 = sphi 0, %s18
      %p15 = scmp.ge.s32.totalorder %s14, 4
      %s24 = sphi 0, %s26
      %s27 = sphi 0, %s24
      %s28 = sphi 0, %s27
      %s44 = sphi 0, %s28
      %s48 = sphi 0, %s48
      %s50 = sphi 0, %s48
      %s51 = sphi 0, %s50
      %s65 = sphi 0, %s51
      %s69 = sphi 0, %s69
      %s71 = sphi 0, %s69
      %s72 = sphi 0, %s71
      %s86 = sphi 0, %s72
      %s90 = sphi 0, %s90
      %s92 = sphi 0, %s90
      %s93 = sphi 0, %s92
      %s107 = sphi 0, %s93
      %s111 = sphi 0, %s111
      %s113 = sphi 0, %s111
      %s114 = sphi 0, %s113
      %s128 = sphi 0, %s114
      %s132 = sphi 0, %s132
      %s134 = sphi 0, %s132
      %s135 = sphi 0, %s134
      %s149 = sphi 0, %s135
      %s153 = sphi 0, %s153
      %s155 = sphi 0, %s153
      %s156 = sphi 0, %s155
      %s170 = sphi 0, %s156
      %s176 = sphi 0, %s178
      %s179 = sphi 0, %s176
      %s180 = sphi 0, %s179
      %s196 = sphi 0, %s180
    $region4: #{tpu_custom_call.1} parent=1 // loop_header_branch
      %17 = sbr.rel (%p15) target = $region8
    $region5: #{tpu_custom_call.1} parent=1 // loop_body
      %s19 = ssub.s32 %s14, 1
      %s20 = ssub.s32 %s14, 2
      %s21 = sadd.s32 %s14, 1
      %s22 = ssub.s32 %s14, %s21
      %p23 = scmp.eq.s32.totalorder %s22, 0
      %s25 = sadd.s32 %s24, 1
      %s26 = scalar_select %p23, %s24, %s25
      %p29 = pneg %p23
      %p30 = scmp.eq.s32.totalorder %s14, 1
      %p31 = por %p29, %p30
      %p32 = scmp.ne.s32.totalorder %s24, %s27
      %p33 = scmp.eq.s32.totalorder %s14, 0
      %p34 = por %p32, %p33
      %p35 = scmp.ne.s32.totalorder %s24, %s27
      %p36 = scmp.eq.s32.totalorder %s19, 1
      %p37 = por %p35, %p36
      %p38 = scmp.ne.s32.totalorder %s27, %s28
      %p39 = scmp.eq.s32.totalorder %s19, 0
      %p40 = por %p38, %p39
      %p41 = scmp.ne.s32.totalorder %s27, %s28
      %p42 = scmp.eq.s32.totalorder %s20, 1
      %p43 = por %p41, %p42
      %p45 = scmp.ne.s32.totalorder %s28, %s44
      %p46 = scmp.eq.s32.totalorder %s20, 0
      %p47 = por %p45, %p46
      %s49 = sadd.s32 %s48, 1
      %p52 = scmp.eq.s32.totalorder %s14, 1
      %p53 = scmp.ne.s32.totalorder %s48, %s50
      %p54 = scmp.eq.s32.totalorder %s14, 0
      %p55 = por %p53, %p54
      %p56 = scmp.ne.s32.totalorder %s48, %s50
      %p57 = scmp.eq.s32.totalorder %s19, 1
      %p58 = por %p56, %p57
      %p59 = scmp.ne.s32.totalorder %s50, %s51
      %p60 = scmp.eq.s32.totalorder %s19, 0
      %p61 = por %p59, %p60
      %p62 = scmp.ne.s32.totalorder %s50, %s51
      %p63 = scmp.eq.s32.totalorder %s20, 1
      %p64 = por %p62, %p63
      %p66 = scmp.ne.s32.totalorder %s51, %s65
      %p67 = scmp.eq.s32.totalorder %s20, 0
      %p68 = por %p66, %p67
      %s70 = sadd.s32 %s69, 1
      %p73 = scmp.eq.s32.totalorder %s14, 1
      %p74 = scmp.ne.s32.totalorder %s69, %s71
      %p75 = scmp.eq.s32.totalorder %s14, 0
      %p76 = por %p74, %p75
      %p77 = scmp.ne.s32.totalorder %s69, %s71
      %p78 = scmp.eq.s32.totalorder %s19, 1
      %p79 = por %p77, %p78
      %p80 = scmp.ne.s32.totalorder %s71, %s72
      %p81 = scmp.eq.s32.totalorder %s19, 0
      %p82 = por %p80, %p81
      %p83 = scmp.ne.s32.totalorder %s71, %s72
      %p84 = scmp.eq.s32.totalorder %s20, 1
      %p85 = por %p83, %p84
      %p87 = scmp.ne.s32.totalorder %s72, %s86
      %p88 = scmp.eq.s32.totalorder %s20, 0
      %p89 = por %p87, %p88
      %s91 = sadd.s32 %s90, 1
      %p94 = scmp.eq.s32.totalorder %s14, 1
      %p95 = scmp.ne.s32.totalorder %s90, %s92
      %p96 = scmp.eq.s32.totalorder %s14, 0
      %p97 = por %p95, %p96
      %p98 = scmp.ne.s32.totalorder %s90, %s92
      %p99 = scmp.eq.s32.totalorder %s19, 1
      %p100 = por %p98, %p99
      %p101 = scmp.ne.s32.totalorder %s92, %s93
      %p102 = scmp.eq.s32.totalorder %s19, 0
      %p103 = por %p101, %p102
      %p104 = scmp.ne.s32.totalorder %s92, %s93
      %p105 = scmp.eq.s32.totalorder %s20, 1
      %p106 = por %p104, %p105
      %p108 = scmp.ne.s32.totalorder %s93, %s107
      %p109 = scmp.eq.s32.totalorder %s20, 0
      %p110 = por %p108, %p109
      %s112 = sadd.s32 %s111, 1
      %p115 = scmp.eq.s32.totalorder %s14, 1
      %p116 = scmp.ne.s32.totalorder %s111, %s113
      %p117 = scmp.eq.s32.totalorder %s14, 0
      %p118 = por %p116, %p117
      %p119 = scmp.ne.s32.totalorder %s111, %s113
      %p120 = scmp.eq.s32.totalorder %s19, 1
      %p121 = por %p119, %p120
      %p122 = scmp.ne.s32.totalorder %s113, %s114
      %p123 = scmp.eq.s32.totalorder %s19, 0
      %p124 = por %p122, %p123
      %p125 = scmp.ne.s32.totalorder %s113, %s114
      %p126 = scmp.eq.s32.totalorder %s20, 1
      %p127 = por %p125, %p126
      %p129 = scmp.ne.s32.totalorder %s114, %s128
      %p130 = scmp.eq.s32.totalorder %s20, 0
      %p131 = por %p129, %p130
      %s133 = sadd.s32 %s132, 1
      %p136 = scmp.eq.s32.totalorder %s14, 1
      %p137 = scmp.ne.s32.totalorder %s132, %s134
      %p138 = scmp.eq.s32.totalorder %s14, 0
      %p139 = por %p137, %p138
      %p140 = scmp.ne.s32.totalorder %s132, %s134
      %p141 = scmp.eq.s32.totalorder %s19, 1
      %p142 = por %p140, %p141
      %p143 = scmp.ne.s32.totalorder %s134, %s135
      %p144 = scmp.eq.s32.totalorder %s19, 0
      %p145 = por %p143, %p144
      %p146 = scmp.ne.s32.totalorder %s134, %s135
      %p147 = scmp.eq.s32.totalorder %s20, 1
      %p148 = por %p146, %p147
      %p150 = scmp.ne.s32.totalorder %s135, %s149
      %p151 = scmp.eq.s32.totalorder %s20, 0
      %p152 = por %p150, %p151
      %s154 = sadd.s32 %s153, 1
      %p157 = scmp.eq.s32.totalorder %s14, 1
      %p158 = scmp.ne.s32.totalorder %s153, %s155
      %p159 = scmp.eq.s32.totalorder %s14, 0
      %p160 = por %p158, %p159
      %p161 = scmp.ne.s32.totalorder %s153, %s155
      %p162 = scmp.eq.s32.totalorder %s19, 1
      %p163 = por %p161, %p162
      %p164 = scmp.ne.s32.totalorder %s155, %s156
      %p165 = scmp.eq.s32.totalorder %s19, 0
      %p166 = por %p164, %p165
      %p167 = scmp.ne.s32.totalorder %s155, %s156
      %p168 = scmp.eq.s32.totalorder %s20, 1
      %p169 = por %p167, %p168
      %p171 = scmp.ne.s32.totalorder %s156, %s170
      %p172 = scmp.eq.s32.totalorder %s20, 0
      %p173 = por %p171, %p172
      %s174 = ssub.s32 %s14, %s21
      %p175 = scmp.eq.s32.totalorder %s174, 0
      %s177 = sadd.s32 %s176, 1
      %s178 = scalar_select %p175, %s176, %s177
      %p181 = pneg %p175
      %p182 = scmp.eq.s32.totalorder %s14, 1
      %p183 = por %p181, %p182
      %p184 = scmp.ne.s32.totalorder %s176, %s179
      %p185 = scmp.eq.s32.totalorder %s14, 0
      %p186 = por %p184, %p185
      %p187 = scmp.ne.s32.totalorder %s176, %s179
      %p188 = scmp.eq.s32.totalorder %s19, 1
      %p189 = por %p187, %p188
      %p190 = scmp.ne.s32.totalorder %s179, %s180
      %p191 = scmp.eq.s32.totalorder %s19, 0
      %p192 = por %p190, %p191
      %p193 = scmp.ne.s32.totalorder %s179, %s180
      %p194 = scmp.eq.s32.totalorder %s20, 1
      %p195 = por %p193, %p194
      %p197 = scmp.ne.s32.totalorder %s180, %s196
      %p198 = scmp.eq.s32.totalorder %s20, 0
      %p199 = por %p197, %p198
      %p200 = scmp.le.s32.totalorder 1, %s14
      %p201 = scmp.lt.s32.totalorder %s14, 3
      %p202 = pnand %p200, %p201
      %p203 = pneg %p202
      // Predicated region
      $region9: #{tpu_custom_call.1} parent=5 // pred_check
        _
      $region10: #{tpu_custom_call.1} parent=5 // pred_check_branch
        %205 = sbr.rel (%p202) target = $region12
      $region11: #{tpu_custom_call.1} parent=5 // pred_region
        %s206 = ssub.s32 %s14, 1
        // Predicated region
        $region13: #{tpu_custom_call.1} parent=11 // pred_check
          %p207 = pneg %p61
        $region14: #{tpu_custom_call.1} parent=11 // pred_check_branch
          %209 = sbr.rel (%p207) target = $region16
        $region15: #{tpu_custom_call.1} parent=11 // pred_region
          _
        $region16: #{tpu_custom_call.1} parent=11 // pred_fallthru
          _
        // Predicated region
        $region17: #{tpu_custom_call.1} parent=11 // pred_check
          %p210 = pneg %p82
        $region18: #{tpu_custom_call.1} parent=11 // pred_check_branch
          %212 = sbr.rel (%p210) target = $region20
        $region19: #{tpu_custom_call.1} parent=11 // pred_region
          _
        $region20: #{tpu_custom_call.1} parent=11 // pred_fallthru
          _
        // Predicated region
        $region21: #{tpu_custom_call.1} parent=11 // pred_check
          %p213 = pneg %p103
        $region22: #{tpu_custom_call.1} parent=11 // pred_check_branch
          %215 = sbr.rel (%p213) target = $region24
        $region23: #{tpu_custom_call.1} parent=11 // pred_region
          %s217 = ssub.s32 2048, 2048
          %218 = vsyncadd [#allocation3], %s217
          %s219 = sshll.u32 [#allocation2], 4
          %s220 = int_to_ptr.vmem [resolvable:$true] %s219
          %225 = dma.hbm_to_vmem [thread:$0]  %s3, 2048, %s220, [#allocation3], 64, 64, 4
        $region24: #{tpu_custom_call.1} parent=11 // pred_fallthru
          _
        // Predicated region
        $region25: #{tpu_custom_call.1} parent=11 // pred_check
          %p226 = pneg %p124
        $region26: #{tpu_custom_call.1} parent=11 // pred_check_branch
          %228 = sbr.rel (%p226) target = $region28
        $region27: #{tpu_custom_call.1} parent=11 // pred_region
          _
        $region28: #{tpu_custom_call.1} parent=11 // pred_fallthru
          _
        // Predicated region
        $region29: #{tpu_custom_call.1} parent=11 // pred_check
          %p229 = pneg %p145
        $region30: #{tpu_custom_call.1} parent=11 // pred_check_branch
          %231 = sbr.rel (%p229) target = $region32
        $region31: #{tpu_custom_call.1} parent=11 // pred_region
          _
        $region32: #{tpu_custom_call.1} parent=11 // pred_fallthru
          _
        // Predicated region
        $region33: #{tpu_custom_call.1} parent=11 // pred_check
          %p232 = pneg %p166
        $region34: #{tpu_custom_call.1} parent=11 // pred_check_branch
          %234 = sbr.rel (%p232) target = $region36
        $region35: #{tpu_custom_call.1} parent=11 // pred_region
          _
        $region36: #{tpu_custom_call.1} parent=11 // pred_fallthru
          _
      $region12: #{tpu_custom_call.1} parent=5 // pred_fallthru
        _
      %p235 = scmp.lt.s32.totalorder %s14, 2
      // Predicated region
      $region37: #{tpu_custom_call.1} parent=5 // pred_check
        %p236 = pneg %p235
      $region38: #{tpu_custom_call.1} parent=5 // pred_check_branch
        %238 = sbr.rel (%p236) target = $region40
      $region39: #{tpu_custom_call.1} parent=5 // pred_region
        // Predicated region
        $region41: #{tpu_custom_call.1} parent=39 // pred_check
          %p239 = pneg %p34
        $region42: #{tpu_custom_call.1} parent=39 // pred_check_branch
          %241 = sbr.rel (%p239) target = $region44
        $region43: #{tpu_custom_call.1} parent=39 // pred_region
          %p242 = scmp.lt.s32.totalorder %s14, 1
          %s243 = scalar_select %p242, %s14, 1
          %s244 = smul.addr %s243, 4
          %s245 = scalar_lea.vmem %s0, %s244
        $region44: #{tpu_custom_call.1} parent=39 // pred_fallthru
          _
      $region40: #{tpu_custom_call.1} parent=5 // pred_fallthru
        _
      %p246 = scmp.le.s32.totalorder 1, %s14
      %p247 = scmp.lt.s32.totalorder %s14, 3
      %p248 = pnand %p246, %p247
      %p249 = pneg %p248
      // Predicated region
      $region45: #{tpu_custom_call.1} parent=5 // pred_check
        _
      $region46: #{tpu_custom_call.1} parent=5 // pred_check_branch
        %251 = sbr.rel (%p248) target = $region48
      $region47: #{tpu_custom_call.1} parent=5 // pred_region
        %s252 = ssub.s32 %s14, 1
        // Predicated region
        $region49: #{tpu_custom_call.1} parent=47 // pred_check
          %p253 = pneg %p103
        $region50: #{tpu_custom_call.1} parent=47 // pred_check_branch
          %255 = sbr.rel (%p253) target = $region52
        $region51: #{tpu_custom_call.1} parent=47 // pred_region
          %256 = dma.done [#allocation3], 2048
        $region52: #{tpu_custom_call.1} parent=47 // pred_fallthru
          _
        %p257 = scmp.lt.s32.totalorder %s19, 1
        %s258 = scalar_select %p257, %s19, 1
        %s259 = smul.addr %s258, 4
        %s260 = scalar_lea.vmem %s0, %s259
        %p261 = pneg %p40
        %p262 = pneg %p37
        %p263 = pneg %p61
        %p264 = pneg %p58
        %p265 = pneg %p82
        %p266 = pneg %p79
        %p267 = pneg %p103
        %p268 = pneg %p100
        %p269 = pneg %p124
        %p270 = pneg %p121
        %p271 = pneg %p145
        %p272 = pneg %p142
        %p273 = pneg %p166
        %p274 = pneg %p163
        %p275 = pneg %p192
        %p276 = pneg %p189
        %p277 = scmp.lt.s32.totalorder %s19, 1
        %s278 = scalar_select %p277, %s19, 1
        %s279 = smul.addr %s278, 8
        %s280 = scalar_lea.vmem %s7, %s279
        %p281 = scmp.lt.s32.totalorder %s19, 1
        %s282 = scalar_select %p281, %s19, 1
        %s283 = smul.addr %s282, 4
        %s284 = scalar_lea.vmem %s0, %s283
        %p285 = scmp.lt.s32.totalorder %s19, 1
        %s286 = scalar_select %p285, %s19, 1
        %s287 = smul.addr %s286, 8
        %s288 = scalar_lea.vmem %s7, %s287
        %v290 = vld [vmem:[%s284] sm:$0xf]
        %v291 = vld [vmem:[%s1] sm:$0xff]
        %v292 = vld [vmem:[%s1 + $0x8] sm:$0xff]
        %v293 = vld [vmem:[%s1 + $0x10] sm:$0xff]
        %v294 = vld [vmem:[%s1 + $0x18] sm:$0xff]
        %v295 = vld [vmem:[%s2] sm:$0x3]
        %v297 = vlaneseq
        %v298 = vshrl.u32 %v297, 7
        %v299 = vsub.s32 0, %v298
        %v300 = vrot.slane %v295, %v299
        %v301 = vlaneseq
        %v302 = vshrl.u32 %v301, 7
        %v303 = vsub.s32 1, %v302
        %v304 = vrot.slane %v295, %v303
        %v311 = vunpack.c.l.b16 %v291
        %v312 = vunpack.c.h.b16 %v291
        %v313 = vunpack.c.l.b16 %v292
        %v314 = vunpack.c.h.b16 %v292
        %v315 = vunpack.c.l.b16 %v293
        %v316 = vunpack.c.h.b16 %v293
        %v317 = vunpack.c.l.b16 %v294
        %v318 = vunpack.c.h.b16 %v294
        %v319 = vpack.c.b16 %v313, %v311
        %v320 = vpack.c.b16 %v314, %v312
        %v321 = vpack.c.b16 %v317, %v315
        %v322 = vpack.c.b16 %v318, %v316
        %vm327 = vcmask 261120
        %v329 = vsel %vm327, %v290, 0
        %331 = vmatprep.subr.bf16.mxu0 0
        %332 = vmatpush1.bf16.msra.mxu0 0
        %333 = vmatprep.subr.bf16.mxu0 0
        %334 = vmatpush1.bf16.msra.mxu0 0
        %335 = vmatprep.subr.bf16.mxu0 0
        %336 = vmatpush1.bf16.msra.mxu0 0
        %337 = vmatprep.subr.bf16.mxu0 0
        %338 = vmatpush1.bf16.msra.mxu0 0
        %339 = vmatprep.subr.bf16.mxu0 0
        %340 = vmatpush1.bf16.msra.mxu0 0
        %341 = vmatprep.subr.bf16.mxu0 0
        %342 = vmatpush1.bf16.msra.mxu0 0
        %343 = vmatprep.subr.bf16.mxu0 %v322
        %344 = vmatpush1.bf16.msra.mxu0 %v321
        %345 = vmatprep.subr.bf16.mxu0 %v320
        %346 = vmatpush1.bf16.msra.mxu0 %v319
        %347 = vmatprep.subr.bf16.mxu0 0
        %348 = vmatpush2.bf16.msra.mxu0 0
        %349 = vmatprep.subr.bf16.mxu0 0
        %350 = vmatpush2.bf16.msra.mxu0 0
        %351 = vmatprep.subr.bf16.mxu0 0
        %352 = vmatpush2.bf16.msra.mxu0 0
        %353 = vmatprep.subr.bf16.mxu0 0
        %354 = vmatpush2.bf16.msra.mxu0 0
        %355 = vmatprep.subr.bf16.mxu0 0
        %356 = vmatpush2.bf16.msra.mxu0 0
        %357 = vmatprep.subr.bf16.mxu0 0
        %358 = vmatpush2.bf16.msra.mxu0 0
        %359 = vmatprep.subr.bf16.mxu0 0
        %360 = vmatpush2.bf16.msra.mxu0 0
        %361 = vmatprep.subr.bf16.mxu0 0
        %362 = vmatpush2.bf16.msra.mxu0 0
        %363 = vmatprep.mubr.bf16.mxu0 0
        %364 = vmatmul.mubr.bf16.gmra.mxu0 %v329
        %v365 = vpop.f32.mrf.mxu0
        %v366 = vadd.f32 %v300, %v365
        %v367 = vpop.f32.mrf.mxu0
        %v368 = vadd.f32 %v304, %v367
        %v369 = vpop.f32.mrf.mxu0
        %v370 = vpop.f32.mrf.mxu0
        %371 = vdwg.mxu0
        %v372 = vmax.f32 %v366, 0.0
        %v373 = vmax.f32 %v368, 0.0
        %v374 = vpack.c.bf16 %v372, %v372
        %v375 = vpack.c.bf16 %v373, %v373
        %v376 = vld [vmem:[#allocation2] sm:$0xf]
        %v377 = vld [vmem:[#allocation2 + $0x4] sm:$0xf]
        %v378 = vld [vmem:[#allocation2 + $0x8] sm:$0xf]
        %v379 = vld [vmem:[#allocation2 + $0xc] sm:$0xf]
        %v380 = vld [vmem:[#allocation2 + $0x10] sm:$0xf]
        %v381 = vld [vmem:[#allocation2 + $0x14] sm:$0xf]
        %v382 = vld [vmem:[#allocation2 + $0x18] sm:$0xf]
        %v383 = vld [vmem:[#allocation2 + $0x1c] sm:$0xf]
        %v384 = vld [vmem:[#allocation2 + $0x20] sm:$0xf]
        %v385 = vld [vmem:[#allocation2 + $0x24] sm:$0xf]
        %v386 = vld [vmem:[#allocation2 + $0x28] sm:$0xf]
        %v387 = vld [vmem:[#allocation2 + $0x2c] sm:$0xf]
        %v388 = vld [vmem:[#allocation2 + $0x30] sm:$0xf]
        %v389 = vld [vmem:[#allocation2 + $0x34] sm:$0xf]
        %v390 = vld [vmem:[#allocation2 + $0x38] sm:$0xf]
        %v391 = vld [vmem:[#allocation2 + $0x3c] sm:$0xf]
        %v392 = vld [vmem:[#allocation2 + $0x40] sm:$0xf]
        %v393 = vld [vmem:[#allocation2 + $0x44] sm:$0xf]
        %v394 = vld [vmem:[#allocation2 + $0x48] sm:$0xf]
        %v395 = vld [vmem:[#allocation2 + $0x4c] sm:$0xf]
        %v396 = vld [vmem:[#allocation2 + $0x50] sm:$0xf]
        %v397 = vld [vmem:[#allocation2 + $0x54] sm:$0xf]
        %v398 = vld [vmem:[#allocation2 + $0x58] sm:$0xf]
        %v399 = vld [vmem:[#allocation2 + $0x5c] sm:$0xf]
        %v400 = vld [vmem:[#allocation2 + $0x60] sm:$0xf]
        %v401 = vld [vmem:[#allocation2 + $0x64] sm:$0xf]
        %v402 = vld [vmem:[#allocation2 + $0x68] sm:$0xf]
        %v403 = vld [vmem:[#allocation2 + $0x6c] sm:$0xf]
        %v404 = vld [vmem:[#allocation2 + $0x70] sm:$0xf]
        %v405 = vld [vmem:[#allocation2 + $0x74] sm:$0xf]
        %v406 = vld [vmem:[#allocation2 + $0x78] sm:$0xf]
        %v407 = vld [vmem:[#allocation2 + $0x7c] sm:$0xf]
        %v408 = vld [vmem:[%s4] sm:$0x1]
        %v410 = vlaneseq
        %v411 = vshrl.u32 %v410, 7
        %v412 = vsub.s32 0, %v411
        %v413 = vrot.slane %v408, %v412
        %v447 = vunpack.c.l.b16 %v376
        %v448 = vunpack.c.l.b16 %v377
        %v449 = vunpack.c.l.b16 %v378
        %v450 = vunpack.c.l.b16 %v379
        %v451 = vunpack.c.l.b16 %v380
        %v452 = vunpack.c.l.b16 %v381
        %v453 = vunpack.c.l.b16 %v382
        %v454 = vunpack.c.l.b16 %v383
        %v455 = vunpack.c.l.b16 %v384
        %v456 = vunpack.c.l.b16 %v385
        %v457 = vunpack.c.l.b16 %v386
        %v458 = vunpack.c.l.b16 %v387
        %v459 = vunpack.c.l.b16 %v388
        %v460 = vunpack.c.l.b16 %v389
        %v461 = vunpack.c.l.b16 %v390
        %v462 = vunpack.c.l.b16 %v391
        %v463 = vunpack.c.l.b16 %v392
        %v464 = vunpack.c.l.b16 %v393
        %v465 = vunpack.c.l.b16 %v394
        %v466 = vunpack.c.l.b16 %v395
        %v467 = vunpack.c.l.b16 %v396
        %v468 = vunpack.c.l.b16 %v397
        %v469 = vunpack.c.l.b16 %v398
        %v470 = vunpack.c.l.b16 %v399
        %v471 = vunpack.c.l.b16 %v400
        %v472 = vunpack.c.l.b16 %v401
        %v473 = vunpack.c.l.b16 %v402
        %v474 = vunpack.c.l.b16 %v403
        %v475 = vunpack.c.l.b16 %v404
        %v476 = vunpack.c.l.b16 %v405
        %v477 = vunpack.c.l.b16 %v406
        %v478 = vunpack.c.l.b16 %v407
        %v479 = vpack.c.b16 %v448, %v447
        %v480 = vpack.c.b16 %v450, %v449
        %v481 = vpack.c.b16 %v452, %v451
        %v482 = vpack.c.b16 %v454, %v453
        %v483 = vpack.c.b16 %v456, %v455
        %v484 = vpack.c.b16 %v458, %v457
        %v485 = vpack.c.b16 %v460, %v459
        %v486 = vpack.c.b16 %v462, %v461
        %v487 = vpack.c.b16 %v464, %v463
        %v488 = vpack.c.b16 %v466, %v465
        %v489 = vpack.c.b16 %v468, %v467
        %v490 = vpack.c.b16 %v470, %v469
        %v491 = vpack.c.b16 %v472, %v471
        %v492 = vpack.c.b16 %v474, %v473
        %v493 = vpack.c.b16 %v476, %v475
        %v494 = vpack.c.b16 %v478, %v477
        %511 = vmatprep.subr.bf16.mxu0 0
        %512 = vmatpush1.bf16.msra.mxu0 %v486
        %513 = vmatprep.subr.bf16.mxu0 0
        %514 = vmatpush1.bf16.msra.mxu0 %v485
        %515 = vmatprep.subr.bf16.mxu0 0
        %516 = vmatpush1.bf16.msra.mxu0 %v484
        %517 = vmatprep.subr.bf16.mxu0 0
        %518 = vmatpush1.bf16.msra.mxu0 %v483
        %519 = vmatprep.subr.bf16.mxu0 0
        %520 = vmatpush1.bf16.msra.mxu0 %v482
        %521 = vmatprep.subr.bf16.mxu0 0
        %522 = vmatpush1.bf16.msra.mxu0 %v481
        %523 = vmatprep.subr.bf16.mxu0 0
        %524 = vmatpush1.bf16.msra.mxu0 %v480
        %525 = vmatprep.subr.bf16.mxu0 0
        %526 = vmatpush1.bf16.msra.mxu0 %v479
        %527 = vmatprep.subr.bf16.mxu0 0
        %528 = vmatpush2.bf16.msra.mxu0 %v494
        %529 = vmatprep.subr.bf16.mxu0 0
        %530 = vmatpush2.bf16.msra.mxu0 %v493
        %531 = vmatprep.subr.bf16.mxu0 0
        %532 = vmatpush2.bf16.msra.mxu0 %v492
        %533 = vmatprep.subr.bf16.mxu0 0
        %534 = vmatpush2.bf16.msra.mxu0 %v491
        %535 = vmatprep.subr.bf16.mxu0 0
        %536 = vmatpush2.bf16.msra.mxu0 %v490
        %537 = vmatprep.subr.bf16.mxu0 0
        %538 = vmatpush2.bf16.msra.mxu0 %v489
        %539 = vmatprep.subr.bf16.mxu0 0
        %540 = vmatpush2.bf16.msra.mxu0 %v488
        %541 = vmatprep.subr.bf16.mxu0 0
        %542 = vmatpush2.bf16.msra.mxu0 %v487
        %543 = vmatprep.mubr.bf16.mxu0 %v375
        %544 = vmatmul.mubr.bf16.gmra.mxu0 %v374
        %v545 = vpop.f32.mrf.mxu0
        %v546 = vadd.f32 %v413, %v545
        %v547 = vpop.f32.mrf.mxu0
        %v548 = vpop.f32.mrf.mxu0
        %v549 = vpop.f32.mrf.mxu0
        %550 = vdwg.mxu0
        %v551 = vmax.f32 %v546, 0.0
        %v552 = vpack.c.bf16 %v551, %v551
        %v553 = vld [vmem:[%s5] sm:$0xf]
        %v554 = vld [vmem:[%s5 + $0x4] sm:$0xf]
        %v555 = vld [vmem:[%s5 + $0x8] sm:$0xf]
        %v556 = vld [vmem:[%s5 + $0xc] sm:$0xf]
        %v557 = vld [vmem:[%s5 + $0x10] sm:$0xf]
        %v558 = vld [vmem:[%s5 + $0x14] sm:$0xf]
        %v559 = vld [vmem:[%s5 + $0x18] sm:$0xf]
        %v560 = vld [vmem:[%s5 + $0x1c] sm:$0xf]
        %v561 = vld [vmem:[%s5 + $0x20] sm:$0xf]
        %v562 = vld [vmem:[%s5 + $0x24] sm:$0xf]
        %v563 = vld [vmem:[%s5 + $0x28] sm:$0xf]
        %v564 = vld [vmem:[%s5 + $0x2c] sm:$0xf]
        %v565 = vld [vmem:[%s5 + $0x30] sm:$0xf]
        %v566 = vld [vmem:[%s5 + $0x34] sm:$0xf]
        %v567 = vld [vmem:[%s5 + $0x38] sm:$0xf]
        %v568 = vld [vmem:[%s5 + $0x3c] sm:$0xf]
        %v569 = vld [vmem:[%s6] sm:$0x1]
        %v571 = vlaneseq
        %v572 = vshrl.u32 %v571, 7
        %v573 = vsub.s32 0, %v572
        %v574 = vrot.slane %v569, %v573
        %v592 = vunpack.c.l.b16 %v553
        %v593 = vunpack.c.l.b16 %v554
        %v594 = vunpack.c.l.b16 %v555
        %v595 = vunpack.c.l.b16 %v556
        %v596 = vunpack.c.l.b16 %v557
        %v597 = vunpack.c.l.b16 %v558
        %v598 = vunpack.c.l.b16 %v559
        %v599 = vunpack.c.l.b16 %v560
        %v600 = vunpack.c.l.b16 %v561
        %v601 = vunpack.c.l.b16 %v562
        %v602 = vunpack.c.l.b16 %v563
        %v603 = vunpack.c.l.b16 %v564
        %v604 = vunpack.c.l.b16 %v565
        %v605 = vunpack.c.l.b16 %v566
        %v606 = vunpack.c.l.b16 %v567
        %v607 = vunpack.c.l.b16 %v568
        %v608 = vpack.c.b16 %v593, %v592
        %v609 = vpack.c.b16 %v595, %v594
        %v610 = vpack.c.b16 %v597, %v596
        %v611 = vpack.c.b16 %v599, %v598
        %v612 = vpack.c.b16 %v601, %v600
        %v613 = vpack.c.b16 %v603, %v602
        %v614 = vpack.c.b16 %v605, %v604
        %v615 = vpack.c.b16 %v607, %v606
        %624 = vmatprep.subr.bf16.mxu0 0
        %625 = vmatpush1.bf16.msra.mxu0 %v615
        %626 = vmatprep.subr.bf16.mxu0 0
        %627 = vmatpush1.bf16.msra.mxu0 %v614
        %628 = vmatprep.subr.bf16.mxu0 0
        %629 = vmatpush1.bf16.msra.mxu0 %v613
        %630 = vmatprep.subr.bf16.mxu0 0
        %631 = vmatpush1.bf16.msra.mxu0 %v612
        %632 = vmatprep.subr.bf16.mxu0 0
        %633 = vmatpush1.bf16.msra.mxu0 %v611
        %634 = vmatprep.subr.bf16.mxu0 0
        %635 = vmatpush1.bf16.msra.mxu0 %v610
        %636 = vmatprep.subr.bf16.mxu0 0
        %637 = vmatpush1.bf16.msra.mxu0 %v609
        %638 = vmatprep.subr.bf16.mxu0 0
        %639 = vmatpush1.bf16.msra.mxu0 %v608
        %640 = vmatprep.subr.bf16.mxu0 0
        %641 = vmatpush2.bf16.msra.mxu0 0
        %642 = vmatprep.subr.bf16.mxu0 0
        %643 = vmatpush2.bf16.msra.mxu0 0
        %644 = vmatprep.subr.bf16.mxu0 0
        %645 = vmatpush2.bf16.msra.mxu0 0
        %646 = vmatprep.subr.bf16.mxu0 0
        %647 = vmatpush2.bf16.msra.mxu0 0
        %648 = vmatprep.subr.bf16.mxu0 0
        %649 = vmatpush2.bf16.msra.mxu0 0
        %650 = vmatprep.subr.bf16.mxu0 0
        %651 = vmatpush2.bf16.msra.mxu0 0
        %652 = vmatprep.subr.bf16.mxu0 0
        %653 = vmatpush2.bf16.msra.mxu0 0
        %654 = vmatprep.subr.bf16.mxu0 0
        %655 = vmatpush2.bf16.msra.mxu0 0
        %656 = vmatprep.mubr.bf16.mxu0 0
        %657 = vmatmul.mubr.bf16.gmra.mxu0 %v552
        %v658 = vpop.f32.mrf.mxu0
        %v659 = vadd.f32 %v574, %v658
        %v660 = vpop.f32.mrf.mxu0
        %v661 = vpop.f32.mrf.mxu0
        %v662 = vpop.f32.mrf.mxu0
        %663 = vdwg.mxu0
        %vm664 = vcmask 15360
        %665 = vst.msk [vmem:[%s288] sm:$0xff] %vm664, %v659
        %p666 = scmp.lt.s32.totalorder %s19, 1
        %s667 = scalar_select %p666, %s19, 1
        %s668 = smul.addr %s667, 8
        %s669 = scalar_lea.vmem %s7, %s668
        // Predicated region
        $region53: #{tpu_custom_call.1} parent=47 // pred_check
          %p670 = pneg %p189
        $region54: #{tpu_custom_call.1} parent=47 // pred_check_branch
          %672 = sbr.rel (%p670) target = $region56
        $region55: #{tpu_custom_call.1} parent=47 // pred_region
          _
        $region56: #{tpu_custom_call.1} parent=47 // pred_fallthru
          _
      $region48: #{tpu_custom_call.1} parent=5 // pred_fallthru
        _
      %p673 = scmp.le.s32.totalorder 2, %s14
      // Predicated region
      $region57: #{tpu_custom_call.1} parent=5 // pred_check
        %p674 = pneg %p673
      $region58: #{tpu_custom_call.1} parent=5 // pred_check_branch
        %676 = sbr.rel (%p674) target = $region60
      $region59: #{tpu_custom_call.1} parent=5 // pred_region
        %s677 = ssub.s32 %s14, 2
        // Predicated region
        $region61: #{tpu_custom_call.1} parent=59 // pred_check
          %p678 = pneg %p195
        $region62: #{tpu_custom_call.1} parent=59 // pred_check_branch
          %680 = sbr.rel (%p678) target = $region64
        $region63: #{tpu_custom_call.1} parent=59 // pred_region
          %p681 = scmp.lt.s32.totalorder %s20, 1
          %s682 = scalar_select %p681, %s20, 1
          %s683 = smul.addr %s682, 8
          %s684 = scalar_lea.vmem %s7, %s683
        $region64: #{tpu_custom_call.1} parent=59 // pred_fallthru
          _
      $region60: #{tpu_custom_call.1} parent=5 // pred_fallthru
        _
    $region6: #{tpu_custom_call.1} parent=1 // loop_footer
      %s18 = sadd.s32 1, %s14
    $region7: #{tpu_custom_call.1} parent=1 // loop_footer_branch
      %13 = sbr.rel target = $region3
    $region8: #{tpu_custom_call.1} parent=1 // loop_exit
      _
    %685 = vsyncpa [#allocation3], 1
    %s686 = scalar_lea.sflag [#allocation3], 1
    %687 = vsyncpa %s686, 1

</llo_original>
